<compile_context>
chip_gen: v7x
topology: tpu7x:2x2x1
jax: 0.10.0
libtpu: 0.0.40
codegen_flags: <defaults>
</compile_context>

<pallas_src>
import jax
import jax.numpy as jnp
from jax.experimental import pallas as pl
from jax.experimental.pallas import tpu as pltpu


def _features_linear_kernel(idx_ref, off_ref, w_ref, b_ref, o_ref):
    # idx_ref: (TB, F) int32  -- per-field indices for this batch tile
    # off_ref: (1, F)  int32  -- per-field vocabulary offsets
    # w_ref:   (V, D)         -- embedding table, V = sum(field_dims)
    # b_ref:   (1, D)         -- bias
    # o_ref:   (TB, D)        -- output tile
    idx = idx_ref[...] + off_ref[...]                      # (TB, F) global ids
    tb, num_fields = idx.shape
    vocab = w_ref.shape[0]

    # One-hot "count" row over the vocabulary, accumulated over fields.
    # F is tiny and static -> unrolled VPU compares, stays 2-D / lane-dense.
    iota_v = jax.lax.broadcasted_iota(jnp.int32, (tb, vocab), 1)   # (TB, V)
    counts = jnp.zeros((tb, vocab), jnp.float32)
    for f in range(num_fields):
        counts = counts + (idx[:, f:f + 1] == iota_v).astype(jnp.float32)

    # Gather + field-sum as a single MXU matmul: (TB, V) @ (V, D) -> (TB, D).
    out = jnp.dot(counts, w_ref[...].astype(jnp.float32),
                  preferred_element_type=jnp.float32)
    out = out + b_ref[...].astype(jnp.float32)
    o_ref[...] = out.astype(o_ref.dtype)


def features_linear(x_idx, offsets, weight, bias, *, block_b=512):
    """FeaturesLinear forward.

    x_idx:   (B, F) integer field indices
    offsets: (F,)   per-field offsets (cumsum of field_dims)
    weight:  (V, D) embedding table, V = sum(field_dims)
    bias:    (D,)
    returns: (B, D)
    """
    B, F = x_idx.shape
    V, D = weight.shape

    # Sublane-aligned batch tile, capped by block_b; pad B to a whole tile.
    TB = min(block_b, ((B + 7) // 8) * 8)
    TB = max(8, (TB // 8) * 8)
    Bp = pl.cdiv(B, TB) * TB

    x_idx = x_idx.astype(jnp.int32)
    if Bp != B:
        x_idx = jnp.pad(x_idx, ((0, Bp - B), (0, 0)))  # padded rows -> index 0

    offsets_2d = offsets.reshape(1, F).astype(jnp.int32)
    bias_2d = bias.reshape(1, D).astype(weight.dtype)

    out = pl.pallas_call(
        _features_linear_kernel,
        out_shape=jax.ShapeDtypeStruct((Bp, D), weight.dtype),
        grid=(Bp // TB,),
        in_specs=[
            pl.BlockSpec((TB, F), lambda i: (i, 0)),   # indices: tiled on batch
            pl.BlockSpec((1, F), lambda i: (0, 0)),    # offsets: same block
            pl.BlockSpec((V, D), lambda i: (0, 0)),    # weight table: resident
            pl.BlockSpec((1, D), lambda i: (0, 0)),    # bias: same block
        ],
        out_specs=pl.BlockSpec((TB, D), lambda i: (i, 0)),
        compiler_params=pltpu.CompilerParams(
            dimension_semantics=("parallel",),
            vmem_limit_bytes=32 * 1024 * 1024,
        ),
    )(x_idx, offsets_2d, weight, bias_2d)

    return out[:B]


def _reference(x_idx, offsets, weight, bias):
    gidx = x_idx + offsets[None, :]
    return jnp.sum(weight[gidx], axis=1) + bias[None, :]


if __name__ == "__main__":
    key = jax.random.PRNGKey(0)
    field_dims = (3, 4, 5, 6)          # small demo vocab
    B = 2
    F = len(field_dims)
    D = 1
    V = sum(field_dims)

    # offsets = (0, *cumsum(field_dims)[:-1])
    offs = [0]
    for fd in field_dims[:-1]:
        offs.append(offs[-1] + fd)
    offsets = jnp.asarray(offs, dtype=jnp.int32)

    k_w, k_b, *k_x = jax.random.split(key, 2 + F)
    cols = [jax.random.randint(k_x[f], (B,), 0, field_dims[f], dtype=jnp.int32)
            for f in range(F)]
    x_idx = jnp.stack(cols, axis=1)                        # (B, F) int32
    weight = jax.random.normal(k_w, (V, D), dtype=jnp.float32)
    bias = jax.random.normal(k_b, (D,), dtype=jnp.float32)

    out = jax.block_until_ready(features_linear(x_idx, offsets, weight, bias))
    ref = _reference(x_idx, offsets, weight, bias)

    assert out.shape == (B, D), out.shape
    assert jnp.allclose(out, ref, atol=1e-5, rtol=1e-5), (out, ref)

    print("KERNEL_OK")
</pallas_src>

<mosaic_0001>
module attributes {stable_mosaic.version = 11 : i64} {
  func.func @_features_linear_kernel(%arg0: i32, %arg1: memref<8x4xi32, #tpu.memory_space<vmem>>, %arg2: memref<1x4xi32, #tpu.memory_space<vmem>>, %arg3: memref<18x1xf32, #tpu.memory_space<vmem>>, %arg4: memref<1x1xf32, #tpu.memory_space<vmem>>, %arg5: memref<8x1xf32, #tpu.memory_space<vmem>>) attributes {dimension_semantics = [#tpu.dimension_semantics<parallel>], iteration_bounds = array<i64: 1>, scalar_prefetch = 0 : i64, scratch_operands = 0 : i64, tpu.core_type = #tpu.core_type<tc>, window_params = [{transform_indices = @transform_0, window_bounds = array<i64: 8, 4>}, {pipeline_mode = #tpu.pipeline_mode<synchronous>, transform_indices = @transform_1, window_bounds = array<i64: 1, 4>}, {pipeline_mode = #tpu.pipeline_mode<synchronous>, transform_indices = @transform_2, window_bounds = array<i64: 18, 1>}, {pipeline_mode = #tpu.pipeline_mode<synchronous>, transform_indices = @transform_3, window_bounds = array<i64: 1, 1>}, {transform_indices = @transform_4, window_bounds = array<i64: 8, 1>}]} {
    %c0 = arith.constant 0 : index
    %c0_0 = arith.constant 0 : index
    %0 = vector.load %arg1[%c0, %c0_0] : memref<8x4xi32, #tpu.memory_space<vmem>>, vector<8x4xi32>
    %c0_1 = arith.constant 0 : index
    %c0_2 = arith.constant 0 : index
    %1 = vector.load %arg2[%c0_1, %c0_2] : memref<1x4xi32, #tpu.memory_space<vmem>>, vector<1x4xi32>
    %2 = vector.broadcast %1 : vector<1x4xi32> to vector<8x4xi32>
    %3 = arith.addi %0, %2 : vector<8x4xi32>
    %4 = tpu.iota {dimensions = array<i32: 1>} : vector<8x18xi32>
    %cst = arith.constant 0.000000e+00 : f32
    %5 = vector.broadcast %cst : f32 to vector<8x18xf32>
    %6 = vector.extract_strided_slice %3 {offsets = [0, 0], sizes = [8, 1], strides = [1, 1]} : vector<8x4xi32> to vector<8x1xi32>
    %7 = vector.broadcast %6 : vector<8x1xi32> to vector<8x18xi32>
    %8 = arith.cmpi eq, %7, %4 : vector<8x18xi32>
    %9 = arith.extui %8 : vector<8x18xi1> to vector<8x18xi32>
    %10 = arith.sitofp %9 : vector<8x18xi32> to vector<8x18xf32>
    %11 = arith.addf %5, %10 : vector<8x18xf32>
    %12 = vector.extract_strided_slice %3 {offsets = [0, 1], sizes = [8, 1], strides = [1, 1]} : vector<8x4xi32> to vector<8x1xi32>
    %13 = vector.broadcast %12 : vector<8x1xi32> to vector<8x18xi32>
    %14 = arith.cmpi eq, %13, %4 : vector<8x18xi32>
    %15 = arith.extui %14 : vector<8x18xi1> to vector<8x18xi32>
    %16 = arith.sitofp %15 : vector<8x18xi32> to vector<8x18xf32>
    %17 = arith.addf %11, %16 : vector<8x18xf32>
    %18 = vector.extract_strided_slice %3 {offsets = [0, 2], sizes = [8, 1], strides = [1, 1]} : vector<8x4xi32> to vector<8x1xi32>
    %19 = vector.broadcast %18 : vector<8x1xi32> to vector<8x18xi32>
    %20 = arith.cmpi eq, %19, %4 : vector<8x18xi32>
    %21 = arith.extui %20 : vector<8x18xi1> to vector<8x18xi32>
    %22 = arith.sitofp %21 : vector<8x18xi32> to vector<8x18xf32>
    %23 = arith.addf %17, %22 : vector<8x18xf32>
    %24 = vector.extract_strided_slice %3 {offsets = [0, 3], sizes = [8, 1], strides = [1, 1]} : vector<8x4xi32> to vector<8x1xi32>
    %25 = vector.broadcast %24 : vector<8x1xi32> to vector<8x18xi32>
    %26 = arith.cmpi eq, %25, %4 : vector<8x18xi32>
    %27 = arith.extui %26 : vector<8x18xi1> to vector<8x18xi32>
    %28 = arith.sitofp %27 : vector<8x18xi32> to vector<8x18xf32>
    %29 = arith.addf %23, %28 : vector<8x18xf32>
    %c0_3 = arith.constant 0 : index
    %c0_4 = arith.constant 0 : index
    %30 = vector.load %arg3[%c0_3, %c0_4] : memref<18x1xf32, #tpu.memory_space<vmem>>, vector<18x1xf32>
    %cst_5 = arith.constant dense<0.000000e+00> : vector<8x1xf32>
    %31 = tpu.matmul %29, %30, %cst_5 {dimension_numbers = #tpu.dot_dimension_numbers<[1], [0], [0], [1], [0, 0, 1, 1], [], []>} : vector<8x18xf32>, vector<18x1xf32>, vector<8x1xf32> -> vector<8x1xf32>
    %c0_6 = arith.constant 0 : index
    %c0_7 = arith.constant 0 : index
    %32 = vector.load %arg4[%c0_6, %c0_7] : memref<1x1xf32, #tpu.memory_space<vmem>>, vector<1x1xf32>
    %33 = vector.broadcast %32 : vector<1x1xf32> to vector<8x1xf32>
    %34 = arith.addf %31, %33 : vector<8x1xf32>
    %c0_8 = arith.constant 0 : index
    %c0_9 = arith.constant 0 : index
    %35 = vector.load %arg5[%c0_8, %c0_9] : memref<8x1xf32, #tpu.memory_space<vmem>>, vector<8x1xf32>
    tpu.vector_store %arg5[%c0_8, %c0_9], %34 {strides = array<i32>} : memref<8x1xf32, #tpu.memory_space<vmem>>, vector<8x1xf32>,
    return
  }
  func.func @transform_0(%arg0: i32) -> (i32, i32) {
    %c0_i32 = arith.constant 0 : i32
    %c0_i32_0 = arith.constant 0 : i32
    return %arg0, %c0_i32 : i32, i32
  }
  func.func @transform_1(%arg0: i32) -> (i32, i32) {
    %c0_i32 = arith.constant 0 : i32
    %c0_i32_0 = arith.constant 0 : i32
    %c0_i32_1 = arith.constant 0 : i32
    return %c0_i32, %c0_i32_0 : i32, i32
  }
  func.func @transform_2(%arg0: i32) -> (i32, i32) {
    %c0_i32 = arith.constant 0 : i32
    %c0_i32_0 = arith.constant 0 : i32
    %c0_i32_1 = arith.constant 0 : i32
    return %c0_i32, %c0_i32_0 : i32, i32
  }
  func.func @transform_3(%arg0: i32) -> (i32, i32) {
    %c0_i32 = arith.constant 0 : i32
    %c0_i32_0 = arith.constant 0 : i32
    %c0_i32_1 = arith.constant 0 : i32
    return %c0_i32, %c0_i32_0 : i32, i32
  }
  func.func @transform_4(%arg0: i32) -> (i32, i32) {
    %c0_i32 = arith.constant 0 : i32
    %c0_i32_0 = arith.constant 0 : i32
    return %arg0, %c0_i32 : i32, i32
  }
}

</mosaic_0001>

<llo_original>
// kernel: tpu_custom_call.1
$region0: #{tpu_custom_call.1}
  #allocation0 [shape = 'u32[]', space=smem, size = 0x4, offset = 0x4, fixed_abs, tag = 'smem constant byte address 0x4 - core index']
  #allocation1 [shape = 'u32[144,128]{1,0:T(1,128)}', space=vmem, size = 0x12000, scoped, tag = 'internal scratch']
  #allocation2 [shape = 'f32[1,1]{1,0:T(1,128)S(1)}', space=vmem, size = 0x200, scoped, tag = 'scoped memory for tpu_custom_call.1']
  %s0 = inlined_call_operand.vmem [shape: s32[8,4], index: 0, kind: input, shape index: {}]
  %s1 = inlined_call_operand.vmem [shape: s32[1,4], index: 1, kind: input, shape index: {}]
  %s2 = inlined_call_operand.vmem [shape: f32[18,1], index: 2, kind: input, shape index: {}]
  %s3 = inlined_call_operand.<no memory space> [shape: f32[1,1], index: 3, kind: input, shape index: {}]
  %s4 = inlined_call_operand.vmem [shape: f32[8,1], index: 4, kind: output, shape index: {}]
  %s5 = sld [smem:[#allocation0]]
  $region26: #{tpu_custom_call.1} parent=0
    _
  %s7 = ssub.s32 1, %s5
  %s8 = scalar_select 0, %s7, %s5
  %v9 = vstv %s3
  %10 = vst [vmem:[#allocation2] sm:$0x1] %v9
  // Predicated region
  $region2: #{tpu_custom_call.1} parent=0 // pred_check
    _
  $region3: #{tpu_custom_call.1} parent=0 // pred_check_branch
    %12 = sbr.rel (0) target = $region5
  $region4: #{tpu_custom_call.1} parent=0 // pred_region
    _
  $region5: #{tpu_custom_call.1} parent=0 // pred_fallthru
    _
  // Predicated region
  $region6: #{tpu_custom_call.1} parent=0 // pred_check
    _
  $region7: #{tpu_custom_call.1} parent=0 // pred_check_branch
    %14 = sbr.rel (0) target = $region9
  $region8: #{tpu_custom_call.1} parent=0 // pred_region
    _
  $region9: #{tpu_custom_call.1} parent=0 // pred_fallthru
    _
  // Predicated region
  $region10: #{tpu_custom_call.1} parent=0 // pred_check
    _
  $region11: #{tpu_custom_call.1} parent=0 // pred_check_branch
    %16 = sbr.rel (0) target = $region13
  $region12: #{tpu_custom_call.1} parent=0 // pred_region
    _
  $region13: #{tpu_custom_call.1} parent=0 // pred_fallthru
    _
  // Predicated region
  $region14: #{tpu_custom_call.1} parent=0 // pred_check
    _
  $region15: #{tpu_custom_call.1} parent=0 // pred_check_branch
    %18 = sbr.rel (0) target = $region17
  $region16: #{tpu_custom_call.1} parent=0 // pred_region
    _
  $region17: #{tpu_custom_call.1} parent=0 // pred_fallthru
    _
  %v19 = vld [vmem:[%s0] sm:$0xff]
  %v20 = vld [vmem:[%s1] sm:$0x1]
  %v21 = vlaneseq
  %v22 = vshrl.u32 %v21, 7
  %v23 = vsub.s32 0, %v22
  %v24 = vrot.slane %v20, %v23
  %v25 = vadd.s32 %v19, %v24
  %v26 = vlaneseq
  %v27 = vand.u32 %v26, 127
  %28 = vset.pattern.permute.xlu0 0
  %29 = vperm.xlu0 %28, %v25
  %v30 = vpop.permute.xlu0 %29
  %vm31 = vcmp.eq.s32.totalorder %v30, %v27
  %v32 = vsel %vm31, 1, 0
  %v33 = vcvt.s32.f32 %v32
  %v34 = vadd.f32 %v33, 0.0
  %35 = vset.pattern.permute.xlu0 1
  %36 = vperm.xlu0 %35, %v25
  %v37 = vpop.permute.xlu0 %36
  %vm38 = vcmp.eq.s32.totalorder %v37, %v27
  %v39 = vsel %vm38, 1, 0
  %v40 = vcvt.s32.f32 %v39
  %v41 = vadd.f32 %v34, %v40
  %42 = vset.pattern.permute.xlu0 2
  %43 = vperm.xlu0 %42, %v25
  %v44 = vpop.permute.xlu0 %43
  %vm45 = vcmp.eq.s32.totalorder %v44, %v27
  %v46 = vsel %vm45, 1, 0
  %v47 = vcvt.s32.f32 %v46
  %v48 = vadd.f32 %v41, %v47
  %49 = vset.pattern.permute.xlu0 3
  %50 = vperm.xlu0 %49, %v25
  %v51 = vpop.permute.xlu0 %50
  %vm52 = vcmp.eq.s32.totalorder %v51, %v27
  %v53 = vsel %vm52, 1, 0
  %v54 = vcvt.s32.f32 %v53
  %v55 = vadd.f32 %v48, %v54
  %v56 = vld [vmem:[%s2] sm:$0xff]
  %v57 = vld [vmem:[%s2 + $0x8] sm:$0xff]
  %v58 = vld [vmem:[%s2 + $0x10] sm:$0x3]
  %v59 = vld [vmem:[#allocation2] sm:$0x1]
  %v61 = vlaneseq
  %v62 = vshrl.u32 %v61, 7
  %v63 = vsub.s32 0, %v62
  %v64 = vrot.slane %v59, %v63
  %vm66 = vcmask 146432
  %v68 = vsel %vm66, %v55, 0
  %vm70 = vcmask 1041408
  %v72 = vsel %vm70, %v58, 0
  %74 = vmatprep.subr.mxu0 0.0
  %75 = vmatpush1.msra.mxu0 %v56
  %76 = vmatprep.subr.mxu0 0.0
  %77 = vmatpush1.msra.mxu0 %v57
  %78 = vmatprep.subr.mxu0 0.0
  %79 = vmatpush1.msra.mxu0 %v72
  %80 = vmatprep.subr.mxu0 0.0
  %81 = vmatpush1.msra.mxu0 0.0
  %82 = vmatprep.subr.mxu0 0.0
  %83 = vmatpush1.msra.mxu0 0.0
  %84 = vmatprep.subr.mxu0 0.0
  %85 = vmatpush1.msra.mxu0 0.0
  %86 = vmatprep.subr.mxu0 0.0
  %87 = vmatpush1.msra.mxu0 0.0
  %88 = vmatprep.subr.mxu0 0.0
  %89 = vmatpush1.msra.mxu0 0.0
  %90 = vmatprep.subr.mxu0 0.0
  %91 = vmatpush1.msra.mxu0 0.0
  %92 = vmatprep.subr.mxu0 0.0
  %93 = vmatpush1.msra.mxu0 0.0
  %94 = vmatprep.subr.mxu0 0.0
  %95 = vmatpush1.msra.mxu0 0.0
  %96 = vmatprep.subr.mxu0 0.0
  %97 = vmatpush1.msra.mxu0 0.0
  %98 = vmatprep.subr.mxu0 0.0
  %99 = vmatpush1.msra.mxu0 0.0
  %100 = vmatprep.subr.mxu0 0.0
  %101 = vmatpush1.msra.mxu0 0.0
  %102 = vmatprep.subr.mxu0 0.0
  %103 = vmatpush1.msra.mxu0 0.0
  %104 = vmatprep.subr.mxu0 0.0
  %105 = vmatpush1.msra.mxu0 0.0
  %106 = vmatprep.subr.mxu0 0.0
  %107 = vmatpush1.msra.mxu0 0.0
  %108 = vmatprep.subr.mxu0 0.0
  %109 = vmatpush1.msra.mxu0 0.0
  %110 = vmatprep.subr.mxu0 0.0
  %111 = vmatpush1.msra.mxu0 0.0
  %112 = vmatprep.subr.mxu0 0.0
  %113 = vmatpush1.msra.mxu0 0.0
  %114 = vmatprep.subr.mxu0 0.0
  %115 = vmatpush1.msra.mxu0 0.0
  %116 = vmatprep.subr.mxu0 0.0
  %117 = vmatpush1.msra.mxu0 0.0
  %118 = vmatprep.subr.mxu0 0.0
  %119 = vmatpush1.msra.mxu0 0.0
  %120 = vmatprep.subr.mxu0 0.0
  %121 = vmatpush1.msra.mxu0 0.0
  %122 = vmatprep.subr.mxu0 0.0
  %123 = vmatpush1.msra.mxu0 0.0
  %124 = vmatprep.subr.mxu0 0.0
  %125 = vmatpush1.msra.mxu0 0.0
  %126 = vmatprep.subr.mxu0 0.0
  %127 = vmatpush1.msra.mxu0 0.0
  %128 = vmatprep.subr.mxu0 0.0
  %129 = vmatpush1.msra.mxu0 0.0
  %130 = vmatprep.subr.mxu0 0.0
  %131 = vmatpush1.msra.mxu0 0.0
  %132 = vmatprep.subr.mxu0 0.0
  %133 = vmatpush1.msra.mxu0 0.0
  %134 = vmatprep.subr.mxu0 0.0
  %135 = vmatpush1.msra.mxu0 0.0
  %136 = vmatprep.subr.mxu0 0.0
  %137 = vmatpush1.msra.mxu0 0.0
  %138 = vmatprep.mubr.f32.mxu0 0.0
  %139 = vmatmul.mubr.f32.gmra.mrb[0].mxu0 %v68
  %v140 = vpop.f32.mrb[0].mxu0
  %v141 = vadd.f32 %v64, %v140
  %v142 = vpop.f32.mrb[0].mxu0
  %143 = vdwg.mxu0
  %vm144 = vcmask 7168
  %145 = vst.msk [vmem:[%s4] sm:$0xff] %vm144, %v141
  // Predicated region
  $region18: #{tpu_custom_call.1} parent=0 // pred_check
    _
  $region19: #{tpu_custom_call.1} parent=0 // pred_check_branch
    %147 = sbr.rel (0) target = $region21
  $region20: #{tpu_custom_call.1} parent=0 // pred_region
    _
  $region21: #{tpu_custom_call.1} parent=0 // pred_fallthru
    _
  // Predicated region
  $region22: #{tpu_custom_call.1} parent=0 // pred_check
    _
  $region23: #{tpu_custom_call.1} parent=0 // pred_check_branch
    %149 = sbr.rel (0) target = $region25
  $region24: #{tpu_custom_call.1} parent=0 // pred_region
    _
  $region25: #{tpu_custom_call.1} parent=0 // pred_fallthru
    _

</llo_original>
